<compile_context>
chip_gen: v7x
topology: tpu7x:2x2x1
jax: 0.10.0
libtpu: 0.0.40
codegen_flags: <defaults>
</compile_context>

<pallas_src>
import functools

import jax
import jax.numpy as jnp
from jax.experimental import pallas as pl
from jax.experimental.pallas import tpu as pltpu


def _round_up(x, m):
    return (x + m - 1) // m * m


def _cdiv(a, b):
    return (a + b - 1) // b


def _classifier_kernel(x_ref, w_ref, o_ref, acc_ref, *, seq_len, seq_tile,
                       mask_seq):
    # x_ref:   (TB, TS, D)   streamed input tile
    # w_ref:   (D, Np) f32   resident, pre-scaled (W.T / S), zero-padded cols
    # o_ref:   (TB, Np)      output tile (same block for every s -> resident)
    # acc_ref: (TB, D) f32   running sum over the sequence axis
    s = pl.program_id(1)

    @pl.when(s == 0)
    def _():
        acc_ref[...] = jnp.zeros_like(acc_ref)

    xv = x_ref[...]
    if mask_seq:
        # Ragged last S tile: zero out rows past the true sequence length so
        # unspecified OOB data never enters the sum.
        seq_idx = s * seq_tile + jax.lax.broadcasted_iota(
            jnp.int32, (1, seq_tile, 1), 1)
        xv = jnp.where(seq_idx < seq_len, xv, jnp.zeros_like(xv))

    # Accumulate the sequence-sum in float32 (no full-tile f32 temporary).
    acc_ref[...] += jnp.sum(xv, axis=1, dtype=jnp.float32)

    @pl.when(s == pl.num_programs(1) - 1)
    def _():
        # 1/S already folded into w_ref, so this is directly mean(x) @ W.T.
        o_ref[...] = jnp.dot(acc_ref[...], w_ref[...],
                             preferred_element_type=jnp.float32
                             ).astype(o_ref.dtype)


def classifier_forward(x, weight, *, target_tile_bytes=8 * 1024 * 1024):
    """x: (B, S, D); weight: (n, D) as in nn.Linear(d_model, n, bias=False).

    Returns (B, n) = mean(x, axis=1) @ weight.T
    """
    B, S, D = x.shape
    n = weight.shape[0]
    itemsize = jnp.dtype(x.dtype).itemsize
    out_itemsize = itemsize

    # Native sublane packing of the input dtype (f32: 8, bf16: 16, int8/fp8: 32).
    sub = {4: 8, 2: 16, 1: 32}.get(itemsize, 8)

    Np = _round_up(n, 128)  # lane-dense weight / output columns

    # ---- batch tile -------------------------------------------------------
    TB = min(128, _round_up(B, 8))
    # v7x megacore: ensure >=2 blocks along the parallel batch axis when possible.
    while TB > 8 and _cdiv(B, TB) < 2:
        TB = max(8, _round_up(TB // 2, 8))
    # Large D: shrink TB (not the TS floor) so even a minimal slab fits the budget.
    while TB > 8 and TB * sub * D * itemsize > target_tile_bytes:
        TB = max(8, _round_up(TB // 2, 8))

    # ---- VMEM budget & sequence tile --------------------------------------
    VMEM_LIMIT = 48 * 1024 * 1024  # under v7x 64 MiB physical; > v5e/v6e defaults
    w_bytes = 2 * D * Np * 4                 # resident f32 weight (count 2 bufs)
    out_bytes = 2 * TB * Np * out_itemsize   # double-buffered output tile
    acc_bytes = TB * D * 4                   # f32 accumulator scratch
    slack = 2 * 1024 * 1024                  # compiler-internal headroom
    # TODO(synk): if the classifier head is huge (w_bytes >> a few MiB), tile
    # the output over an N grid axis instead of keeping the weight resident.
    x_budget_per_buf = (VMEM_LIMIT - w_bytes - out_bytes - acc_bytes - slack) // 2
    per_buf = max(sub * TB * D * itemsize,
                  min(target_tile_bytes, x_budget_per_buf))
    ts_cap = max(sub, (per_buf // (TB * D * itemsize)) // sub * sub)
    TS = min(_round_up(S, sub), ts_cap)
    mask_seq = (S % TS) != 0

    grid = (_cdiv(B, TB), _cdiv(S, TS))

    # Tiny host-side weight prep only: transpose, fold 1/S, pad cols to Np.
    w_t = weight.astype(jnp.float32).T * (1.0 / S)     # (D, n)
    w_t = jnp.pad(w_t, ((0, 0), (0, Np - n)))          # (D, Np)

    kernel = functools.partial(_classifier_kernel, seq_len=S, seq_tile=TS,
                               mask_seq=mask_seq)

    out_p = pl.pallas_call(
        kernel,
        out_shape=jax.ShapeDtypeStruct((B, Np), x.dtype),
        grid_spec=pltpu.PrefetchScalarGridSpec(
            num_scalar_prefetch=0,
            grid=grid,
            in_specs=[
                # Streamed input tiles over (batch-tile, seq-tile); full D.
                pl.BlockSpec((TB, TS, D), lambda b, s: (b, s, 0)),
                # Constant index map -> weight DMA'd once, stays resident.
                pl.BlockSpec((D, Np), lambda b, s: (0, 0)),
            ],
            # Same output block for every s -> resident accumulator target.
            out_specs=pl.BlockSpec((TB, Np), lambda b, s: (b, 0)),
            scratch_shapes=[pltpu.VMEM((TB, D), jnp.float32)],
        ),
        compiler_params=pltpu.CompilerParams(
            dimension_semantics=("parallel", "arbitrary"),
            vmem_limit_bytes=VMEM_LIMIT),
        cost_estimate=pl.CostEstimate(
            flops=2 * B * D * n,
            transcendentals=0,
            bytes_accessed=(B * S * D * itemsize + D * Np * 4
                            + B * Np * out_itemsize)),
    )(x, w_t)

    return out_p[:, :n]


if __name__ == "__main__":
    # Small shapes consistent with the module: (batch, seq, d_model), n classes.
    B, S, D = 2, 8, 32
    n = 3

    key = jax.random.PRNGKey(0)
    kx, kw = jax.random.split(key)

    x = jax.random.normal(kx, (B, S, D), dtype=jnp.float32)
    # Weight shaped like nn.Linear(d_model, n): (n, D).
    bound = 1.0 / (D ** 0.5)
    weight = jax.random.uniform(kw, (n, D), dtype=jnp.float32,
                                minval=-bound, maxval=bound)

    out = jax.block_until_ready(classifier_forward(x, weight))

    # Reference check in plain JAX.
    ref = jnp.mean(x, axis=1) @ weight.T
    assert out.shape == (B, n)
    assert jnp.allclose(out, ref, atol=1e-5, rtol=1e-5)

    print("KERNEL_OK")
</pallas_src>

<mosaic_0001>
module attributes {stable_mosaic.version = 11 : i64} {
  func.func @_classifier_kernel(%arg0: i32, %arg1: i32, %arg2: memref<8x8x32xf32, #tpu.memory_space<vmem>>, %arg3: memref<32x128xf32, #tpu.memory_space<vmem>>, %arg4: memref<8x128xf32, #tpu.memory_space<vmem>>, %arg5: memref<8x32xf32, #tpu.memory_space<vmem>>) attributes {dimension_semantics = [#tpu.dimension_semantics<parallel>, #tpu.dimension_semantics<arbitrary>], iteration_bounds = array<i64: 1, 1>, scalar_prefetch = 0 : i64, scratch_operands = 1 : i64, tpu.core_type = #tpu.core_type<tc>, window_params = [{transform_indices = @transform_0, window_bounds = array<i64: 8, 8, 32>}, {pipeline_mode = #tpu.pipeline_mode<synchronous>, transform_indices = @transform_1, window_bounds = array<i64: 32, 128>}, {transform_indices = @transform_2, window_bounds = array<i64: 8, 128>}]} {
    %c0_i32 = arith.constant 0 : i32
    %0 = arith.cmpi eq, %arg1, %c0_i32 : i32
    %1 = arith.extui %0 : i1 to i32
    %c0_i32_0 = arith.constant 0 : i32
    %2 = arith.cmpi ne, %1, %c0_i32_0 : i32
    scf.if %2 {
      %cst_9 = arith.constant 0.000000e+00 : f32
      %11 = vector.broadcast %cst_9 : f32 to vector<8x32xf32>
      %c0_10 = arith.constant 0 : index
      %c0_11 = arith.constant 0 : index
      %12 = vector.load %arg5[%c0_10, %c0_11] : memref<8x32xf32, #tpu.memory_space<vmem>>, vector<8x32xf32>
      tpu.vector_store %arg5[%c0_10, %c0_11], %11 {strides = array<i32>} : memref<8x32xf32, #tpu.memory_space<vmem>>, vector<8x32xf32>,
    } else {
    }
    %c0 = arith.constant 0 : index
    %c0_1 = arith.constant 0 : index
    %c0_2 = arith.constant 0 : index
    %3 = vector.load %arg2[%c0, %c0_1, %c0_2] : memref<8x8x32xf32, #tpu.memory_space<vmem>>, vector<8x8x32xf32>
    %c0_3 = arith.constant 0 : index
    %c0_4 = arith.constant 0 : index
    %4 = vector.load %arg5[%c0_3, %c0_4] : memref<8x32xf32, #tpu.memory_space<vmem>>, vector<8x32xf32>
    %cst = arith.constant dense<0.000000e+00> : vector<8x32xf32>
    %5 = vector.multi_reduction <add>, %3, %cst [1] : vector<8x8x32xf32> to vector<8x32xf32>
    %6 = arith.addf %4, %5 : vector<8x32xf32>
    %c0_5 = arith.constant 0 : index
    %c0_6 = arith.constant 0 : index
    %7 = vector.load %arg5[%c0_5, %c0_6] : memref<8x32xf32, #tpu.memory_space<vmem>>, vector<8x32xf32>
    tpu.vector_store %arg5[%c0_5, %c0_6], %6 {strides = array<i32>} : memref<8x32xf32, #tpu.memory_space<vmem>>, vector<8x32xf32>,
    %c0_i32_7 = arith.constant 0 : i32
    %8 = arith.cmpi eq, %arg1, %c0_i32_7 : i32
    %9 = arith.extui %8 : i1 to i32
    %c0_i32_8 = arith.constant 0 : i32
    %10 = arith.cmpi ne, %9, %c0_i32_8 : i32
    scf.if %10 {
      %c0_9 = arith.constant 0 : index
      %c0_10 = arith.constant 0 : index
      %11 = vector.load %arg5[%c0_9, %c0_10] : memref<8x32xf32, #tpu.memory_space<vmem>>, vector<8x32xf32>
      %c0_11 = arith.constant 0 : index
      %c0_12 = arith.constant 0 : index
      %12 = vector.load %arg3[%c0_11, %c0_12] : memref<32x128xf32, #tpu.memory_space<vmem>>, vector<32x128xf32>
      %cst_13 = arith.constant dense<0.000000e+00> : vector<8x128xf32>
      %13 = tpu.matmul %11, %12, %cst_13 {dimension_numbers = #tpu.dot_dimension_numbers<[1], [0], [0], [1], [0, 0, 1, 1], [], []>} : vector<8x32xf32>, vector<32x128xf32>, vector<8x128xf32> -> vector<8x128xf32>
      %c0_14 = arith.constant 0 : index
      %c0_15 = arith.constant 0 : index
      %14 = vector.load %arg4[%c0_14, %c0_15] : memref<8x128xf32, #tpu.memory_space<vmem>>, vector<8x128xf32>
      tpu.vector_store %arg4[%c0_14, %c0_15], %13 {strides = array<i32>} : memref<8x128xf32, #tpu.memory_space<vmem>>, vector<8x128xf32>,
    } else {
    }
    return
  }
  func.func @transform_0(%arg0: i32, %arg1: i32) -> (i32, i32, i32) {
    %c0_i32 = arith.constant 0 : i32
    %c0_i32_0 = arith.constant 0 : i32
    return %arg0, %arg1, %c0_i32 : i32, i32, i32
  }
  func.func @transform_1(%arg0: i32, %arg1: i32) -> (i32, i32) {
    %c0_i32 = arith.constant 0 : i32
    %c0_i32_0 = arith.constant 0 : i32
    %c0_i32_1 = arith.constant 0 : i32
    return %c0_i32, %c0_i32_0 : i32, i32
  }
  func.func @transform_2(%arg0: i32, %arg1: i32) -> (i32, i32) {
    %c0_i32 = arith.constant 0 : i32
    %c0_i32_0 = arith.constant 0 : i32
    return %arg0, %c0_i32 : i32, i32
  }
}

</mosaic_0001>

<llo_original>
// kernel: tpu_custom_call.1
$region0: #{tpu_custom_call.1}
  #allocation0 [shape = 'u32[]', space=smem, size = 0x4, offset = 0x4, fixed_abs, tag = 'smem constant byte address 0x4 - core index']
  #allocation1 [shape = 'u32[144,128]{1,0:T(1,128)}', space=vmem, size = 0x12000, scoped, tag = 'internal scratch']
  #allocation2 [shape = 'f32[8,32]{1,0:T(8,128)}', space=vmem, size = 0x1000, scoped, tag = 'scratch operand']
  %s0 = inlined_call_operand.hbm [shape: f32[2,8,32], index: 0, kind: input, shape index: {}]
  %s1 = inlined_call_operand.hbm [shape: f32[32,128], index: 1, kind: input, shape index: {}]
  %s2 = inlined_call_operand.hbm [shape: f32[2,128], index: 2, kind: output, shape index: {}]
  %s3 = sld [smem:[#allocation0]]
  $region34: #{tpu_custom_call.1} parent=0
    _
  %s5 = ssub.s32 1, %s3
  %s6 = scalar_select 0, %s5, %s3
  $region1: #{tpu_custom_call.1} parent=0
    #allocation3 [shape = 'u8[32768]{0}', space=vmem, size = 0x8000, scoped, tag = 'input window, operand 0, single buffered']
    #allocation4 [shape = 's32[1]{0}', space=sflag, size = 0x4, scoped, tag = 'scoped memory for tpu_custom_call.1']
    #allocation5 [shape = 's32[1]{0}', space=sflag, size = 0x4, scoped, tag = 'scoped memory for tpu_custom_call.1']
    #allocation6 [shape = 'u8[16384]{0}', space=vmem, size = 0x4000, scoped, tag = 'input window, operand 1, single buffered']
    #allocation7 [shape = 's32[1]{0}', space=sflag, size = 0x4, scoped, tag = 'scoped memory for tpu_custom_call.1']
    #allocation8 [shape = 'u8[4096]{0}', space=vmem, size = 0x1000, scoped, tag = 'output window, operand 0, single buffered']
    %7 = vsyncpa [#allocation4], 0
    %8 = vsyncpa [#allocation7], 0
    %9 = vsyncpa [#allocation5], 0
    // Predicated region
    $region2: #{tpu_custom_call.1} parent=1 // pred_check
      _
    $region3: #{tpu_custom_call.1} parent=1 // pred_check_branch
      %11 = sbr.rel (0) target = $region5
    $region4: #{tpu_custom_call.1} parent=1 // pred_region
      %s13 = ssub.s32 1024, 256
      %14 = vsyncadd [#allocation4], %s13
      %s15 = sshll.u32 [#allocation3], 4
      %s16 = int_to_ptr.vmem [resolvable:$true] %s15
      %21 = dma.hbm_to_vmem [thread:$0]  %s0, 256, %s16, [#allocation4], 128, 128, 8
    $region5: #{tpu_custom_call.1} parent=1 // pred_fallthru
      _
    // Predicated region
    $region6: #{tpu_custom_call.1} parent=1 // pred_check
      _
    $region7: #{tpu_custom_call.1} parent=1 // pred_check_branch
      %23 = sbr.rel (0) target = $region9
    $region8: #{tpu_custom_call.1} parent=1 // pred_region
      %s25 = ssub.s32 512, 512
      %26 = vsyncadd [#allocation7], %s25
      %s27 = sshll.u32 [#allocation6], 4
      %s28 = int_to_ptr.vmem [resolvable:$true] %s27
      %33 = dma.hbm_to_vmem [thread:$0]  %s1, 512, %s28, [#allocation7], 128, 128, 8
    $region9: #{tpu_custom_call.1} parent=1 // pred_fallthru
      _
    // Predicated region
    $region10: #{tpu_custom_call.1} parent=1 // pred_check
      _
    $region11: #{tpu_custom_call.1} parent=1 // pred_check_branch
      %35 = sbr.rel (0) target = $region13
    $region12: #{tpu_custom_call.1} parent=1 // pred_region
      %36 = dma.done [#allocation4], 1024
    $region13: #{tpu_custom_call.1} parent=1 // pred_fallthru
      _
    // Predicated region
    $region14: #{tpu_custom_call.1} parent=1 // pred_check
      _
    $region15: #{tpu_custom_call.1} parent=1 // pred_check_branch
      %38 = sbr.rel (0) target = $region17
    $region16: #{tpu_custom_call.1} parent=1 // pred_region
      %39 = dma.done [#allocation7], 512
    $region17: #{tpu_custom_call.1} parent=1 // pred_fallthru
      _
    %p40 = scmp.eq.s32.totalorder 0, 0
    // Predicated region
    $region18: #{tpu_custom_call.1} parent=1 // pred_check
      %p41 = pneg %p40
    $region19: #{tpu_custom_call.1} parent=1 // pred_check_branch
      %43 = sbr.rel (%p41) target = $region21
    $region20: #{tpu_custom_call.1} parent=1 // pred_region
      %vm44 = vcmask 261120
      %45 = vst.msk [vmem:[#allocation2] sm:$0xff] %vm44, 0.0
    $region21: #{tpu_custom_call.1} parent=1 // pred_fallthru
      _
    %v46 = vld [vmem:[#allocation3] sm:$0xff]
    %v47 = vld [vmem:[#allocation3 + $0x8] sm:$0xff]
    %v48 = vld [vmem:[#allocation3 + $0x10] sm:$0xff]
    %v49 = vld [vmem:[#allocation3 + $0x18] sm:$0xff]
    %v50 = vld [vmem:[#allocation3 + $0x20] sm:$0xff]
    %v51 = vld [vmem:[#allocation3 + $0x28] sm:$0xff]
    %v52 = vld [vmem:[#allocation3 + $0x30] sm:$0xff]
    %v53 = vld [vmem:[#allocation3 + $0x38] sm:$0xff]
    %v54 = vld [vmem:[#allocation2] sm:$0xff]
    %vm55 = vcmask 261120
    %v56 = vsel %vm55, %v46, 0.0
    %v57 = vrot.slane %v56, 4
    %v58 = vadd.f32 %v56, %v57
    %v59 = vrot.slane %v58, 2
    %v60 = vadd.f32 %v58, %v59
    %v61 = vrot.slane %v60, 1
    %v62 = vadd.f32 %v60, %v61
    %v63 = vsel %vm55, %v47, 0.0
    %v64 = vrot.slane %v63, 4
    %v65 = vadd.f32 %v63, %v64
    %v66 = vrot.slane %v65, 2
    %v67 = vadd.f32 %v65, %v66
    %v68 = vrot.slane %v67, 1
    %v69 = vadd.f32 %v67, %v68
    %v70 = vsel %vm55, %v48, 0.0
    %v71 = vrot.slane %v70, 4
    %v72 = vadd.f32 %v70, %v71
    %v73 = vrot.slane %v72, 2
    %v74 = vadd.f32 %v72, %v73
    %v75 = vrot.slane %v74, 1
    %v76 = vadd.f32 %v74, %v75
    %v77 = vsel %vm55, %v49, 0.0
    %v78 = vrot.slane %v77, 4
    %v79 = vadd.f32 %v77, %v78
    %v80 = vrot.slane %v79, 2
    %v81 = vadd.f32 %v79, %v80
    %v82 = vrot.slane %v81, 1
    %v83 = vadd.f32 %v81, %v82
    %v84 = vsel %vm55, %v50, 0.0
    %v85 = vrot.slane %v84, 4
    %v86 = vadd.f32 %v84, %v85
    %v87 = vrot.slane %v86, 2
    %v88 = vadd.f32 %v86, %v87
    %v89 = vrot.slane %v88, 1
    %v90 = vadd.f32 %v88, %v89
    %v91 = vsel %vm55, %v51, 0.0
    %v92 = vrot.slane %v91, 4
    %v93 = vadd.f32 %v91, %v92
    %v94 = vrot.slane %v93, 2
    %v95 = vadd.f32 %v93, %v94
    %v96 = vrot.slane %v95, 1
    %v97 = vadd.f32 %v95, %v96
    %v98 = vsel %vm55, %v52, 0.0
    %v99 = vrot.slane %v98, 4
    %v100 = vadd.f32 %v98, %v99
    %v101 = vrot.slane %v100, 2
    %v102 = vadd.f32 %v100, %v101
    %v103 = vrot.slane %v102, 1
    %v104 = vadd.f32 %v102, %v103
    %v105 = vsel %vm55, %v53, 0.0
    %v106 = vrot.slane %v105, 4
    %v107 = vadd.f32 %v105, %v106
    %v108 = vrot.slane %v107, 2
    %v109 = vadd.f32 %v107, %v108
    %v110 = vrot.slane %v109, 1
    %v111 = vadd.f32 %v109, %v110
    %vm120 = vcmask 1041409
    %v121 = vsel %vm120, %v69, %v62
    %vm122 = vcmask 1042434
    %v123 = vsel %vm122, %v76, %v121
    %vm124 = vcmask 1043459
    %v125 = vsel %vm124, %v83, %v123
    %vm126 = vcmask 1044484
    %v127 = vsel %vm126, %v90, %v125
    %vm128 = vcmask 1045509
    %v129 = vsel %vm128, %v97, %v127
    %vm130 = vcmask 1046534
    %v131 = vsel %vm130, %v104, %v129
    %vm132 = vcmask 1047559
    %v133 = vsel %vm132, %v111, %v131
    %v135 = vadd.f32 %v54, %v133
    %136 = vst.msk [vmem:[#allocation2] sm:$0xff] %vm55, %v135
    // Predicated region
    $region22: #{tpu_custom_call.1} parent=1 // pred_check
      %p137 = pneg %p40
    $region23: #{tpu_custom_call.1} parent=1 // pred_check_branch
      %139 = sbr.rel (%p137) target = $region25
    $region24: #{tpu_custom_call.1} parent=1 // pred_region
      %v140 = vld [vmem:[#allocation2] sm:$0xff]
      %v141 = vld [vmem:[#allocation6] sm:$0xff]
      %v142 = vld [vmem:[#allocation6 + $0x8] sm:$0xff]
      %v143 = vld [vmem:[#allocation6 + $0x10] sm:$0xff]
      %v144 = vld [vmem:[#allocation6 + $0x18] sm:$0xff]
      %v146 = vsel %vm55, %v140, 0
      %148 = vmatprep.subr.mxu0 0.0
      %149 = vmatpush1.msra.mxu0 %v141
      %150 = vmatprep.subr.mxu0 0.0
      %151 = vmatpush1.msra.mxu0 %v142
      %152 = vmatprep.subr.mxu0 0.0
      %153 = vmatpush1.msra.mxu0 %v143
      %154 = vmatprep.subr.mxu0 0.0
      %155 = vmatpush1.msra.mxu0 %v144
      %156 = vmatprep.subr.mxu0 0.0
      %157 = vmatpush1.msra.mxu0 0.0
      %158 = vmatprep.subr.mxu0 0.0
      %159 = vmatpush1.msra.mxu0 0.0
      %160 = vmatprep.subr.mxu0 0.0
      %161 = vmatpush1.msra.mxu0 0.0
      %162 = vmatprep.subr.mxu0 0.0
      %163 = vmatpush1.msra.mxu0 0.0
      %164 = vmatprep.subr.mxu0 0.0
      %165 = vmatpush1.msra.mxu0 0.0
      %166 = vmatprep.subr.mxu0 0.0
      %167 = vmatpush1.msra.mxu0 0.0
      %168 = vmatprep.subr.mxu0 0.0
      %169 = vmatpush1.msra.mxu0 0.0
      %170 = vmatprep.subr.mxu0 0.0
      %171 = vmatpush1.msra.mxu0 0.0
      %172 = vmatprep.subr.mxu0 0.0
      %173 = vmatpush1.msra.mxu0 0.0
      %174 = vmatprep.subr.mxu0 0.0
      %175 = vmatpush1.msra.mxu0 0.0
      %176 = vmatprep.subr.mxu0 0.0
      %177 = vmatpush1.msra.mxu0 0.0
      %178 = vmatprep.subr.mxu0 0.0
      %179 = vmatpush1.msra.mxu0 0.0
      %180 = vmatprep.subr.mxu0 0.0
      %181 = vmatpush1.msra.mxu0 0.0
      %182 = vmatprep.subr.mxu0 0.0
      %183 = vmatpush1.msra.mxu0 0.0
      %184 = vmatprep.subr.mxu0 0.0
      %185 = vmatpush1.msra.mxu0 0.0
      %186 = vmatprep.subr.mxu0 0.0
      %187 = vmatpush1.msra.mxu0 0.0
      %188 = vmatprep.subr.mxu0 0.0
      %189 = vmatpush1.msra.mxu0 0.0
      %190 = vmatprep.subr.mxu0 0.0
      %191 = vmatpush1.msra.mxu0 0.0
      %192 = vmatprep.subr.mxu0 0.0
      %193 = vmatpush1.msra.mxu0 0.0
      %194 = vmatprep.subr.mxu0 0.0
      %195 = vmatpush1.msra.mxu0 0.0
      %196 = vmatprep.subr.mxu0 0.0
      %197 = vmatpush1.msra.mxu0 0.0
      %198 = vmatprep.subr.mxu0 0.0
      %199 = vmatpush1.msra.mxu0 0.0
      %200 = vmatprep.subr.mxu0 0.0
      %201 = vmatpush1.msra.mxu0 0.0
      %202 = vmatprep.subr.mxu0 0.0
      %203 = vmatpush1.msra.mxu0 0.0
      %204 = vmatprep.subr.mxu0 0.0
      %205 = vmatpush1.msra.mxu0 0.0
      %206 = vmatprep.subr.mxu0 0.0
      %207 = vmatpush1.msra.mxu0 0.0
      %208 = vmatprep.subr.mxu0 0.0
      %209 = vmatpush1.msra.mxu0 0.0
      %210 = vmatprep.subr.mxu0 0.0
      %211 = vmatpush1.msra.mxu0 0.0
      %212 = vmatprep.mubr.f32.mxu0 0.0
      %213 = vmatmul.mubr.f32.gmra.mrb[0].mxu0 %v146
      %v214 = vpop.f32.mrb[0].mxu0
      %v215 = vadd.f32 0.0, %v214
      %v216 = vpop.f32.mrb[0].mxu0
      %217 = vdwg.mxu0
      %218 = vst [vmem:[#allocation8] sm:$0xff] %v215
    $region25: #{tpu_custom_call.1} parent=1 // pred_fallthru
      _
    // Predicated region
    $region26: #{tpu_custom_call.1} parent=1 // pred_check
      _
    $region27: #{tpu_custom_call.1} parent=1 // pred_check_branch
      %220 = sbr.rel (0) target = $region29
    $region28: #{tpu_custom_call.1} parent=1 // pred_region
      %s222 = ssub.s32 128, 32
      %223 = vsyncadd [#allocation5], %s222
      %s224 = sshll.u32 [#allocation8], 4
      %s225 = int_to_ptr.vmem [resolvable:$true] %s224
      %230 = dma.vmem_to_hbm [thread:$0]  %s225, 32, %s2, [#allocation5], 32, 32, 2
    $region29: #{tpu_custom_call.1} parent=1 // pred_fallthru
      _
    // Predicated region
    $region30: #{tpu_custom_call.1} parent=1 // pred_check
      _
    $region31: #{tpu_custom_call.1} parent=1 // pred_check_branch
      %232 = sbr.rel (0) target = $region33
    $region32: #{tpu_custom_call.1} parent=1 // pred_region
      %233 = dma.done [#allocation5], 128
    $region33: #{tpu_custom_call.1} parent=1 // pred_fallthru
      _
    %234 = vsyncpa [#allocation4], 1
    %235 = vsyncpa [#allocation7], 1
    %236 = vsyncpa [#allocation5], 1

</llo_original>
